<compile_context>
chip_gen: v7x
topology: tpu7x:2x2x1
jax: 0.10.0
libtpu: 0.0.40
codegen_flags: <defaults>
</compile_context>

<pallas_src>
import itertools

import jax
import jax.numpy as jnp
import numpy as np
from jax.experimental import pallas as pl
from jax.experimental.pallas import tpu as pltpu

EPS = 1e-5                    # spnn.BatchNorm default eps
_VMEM_BUDGET = 40 << 20       # conservative: fits v7x (64 MiB), v6e/v5e larger


def _round_up(a, b):
    return (a + b - 1) // b * b


def matmul_stats_kernel(x_ref, w_ref, y_ref, stats_ref):
    """One lane-dense matmul per N-tile + partial BN statistics.

    x_ref     : [TILE_N, KC_pad]  bf16 (gathered feats, K folded into contraction)
    w_ref     : [KC_pad, C_pad]   bf16 (full folded weight, VMEM resident)
    y_ref     : [TILE_N, C_pad]   bf16 pre-BN output tile (stats taken in f32 first)
    stats_ref : [1, 8, C_pad]     f32  row 0 = sum(y), row 1 = sum(y*y)
    """
    y = jnp.dot(x_ref[...], w_ref[...], preferred_element_type=jnp.float32)
    s = jnp.sum(y, axis=0, keepdims=True)
    ss = jnp.sum(y * y, axis=0, keepdims=True)
    pad = jnp.zeros((6, s.shape[1]), jnp.float32)
    stats_ref[...] = jnp.concatenate([s, ss, pad], axis=0)[None]
    y_ref[...] = y.astype(y_ref.dtype)


def bn_relu_kernel(y_ref, scale_ref, shift_ref, o_ref):
    """Streaming BN affine + ReLU (scale/shift precomputed in the wrapper).

    y_ref     : [TILE2, C_pad] bf16
    scale_ref : [1, C_pad]     f32
    shift_ref : [1, C_pad]     f32
    """
    y = y_ref[...].astype(jnp.float32)
    o_ref[...] = jnp.maximum(y * scale_ref[...] + shift_ref[...], 0.0).astype(o_ref.dtype)


def basic_deconvolution_block(feats, coords, weight, gamma, beta, grid_size,
                              *, tile_n=512, tile_n2=4096):
    """Sparse transposed Conv3d (stride=1) + BatchNorm (training stats) + ReLU."""
    N, inc = feats.shape
    K, _, outc = weight.shape
    ks = round(K ** (1.0 / 3.0))
    r = ks // 2

    # ---- host glue: kernel map (per-point neighbor gather indices [N, K]) ----
    # NOTE: built with NumPy on host (assumes non-negative voxel coords < grid_size);
    # production point clouds should use a hashed kernel map instead of a dense grid.
    coords_np = np.asarray(coords).astype(np.int64)
    vox = -np.ones((grid_size,) * 3, dtype=np.int64)
    vox[coords_np[:, 0], coords_np[:, 1], coords_np[:, 2]] = np.arange(N)
    offsets = list(itertools.product(range(-r, r + 1), repeat=3))
    nbr = np.full((N, K), N, dtype=np.int32)  # index N == zero-pad sentinel row
    for k, off in enumerate(offsets):
        nb = coords_np + np.asarray(off, dtype=np.int64)
        ok = np.all((nb >= 0) & (nb < grid_size), axis=1)
        nb_c = np.clip(nb, 0, grid_size - 1)
        idx = np.where(ok, vox[nb_c[:, 0], nb_c[:, 1], nb_c[:, 2]], -1)
        nbr[:, k] = np.where(idx >= 0, idx, N).astype(np.int32)

    # ---- fold K into contraction dim; pad to MXU/lane-friendly sizes ----
    kc = K * inc
    kc_pad = _round_up(kc, 128)
    c_pad = _round_up(outc, 128)

    # Pass-1 N tile: multiple of 16 (bf16 sublane packing); keep >= 2 tiles when
    # N allows (megacore / v7x two-TC sharding), and shrink until VMEM fits.
    t_n = min(tile_n, _round_up(N, 16))
    if N >= 32:
        t_n = min(t_n, _round_up((N + 1) // 2, 16))

    def _vmem_pass1(t):
        return (2 * t * kc_pad * 2          # x bf16, double-buffered
                + 2 * kc_pad * c_pad * 2    # resident weight (2 buffers allocated)
                + 2 * t * c_pad * 2         # y bf16 out, double-buffered
                + 2 * 8 * c_pad * 4)        # stats out

    while t_n > 16 and _vmem_pass1(t_n) > _VMEM_BUDGET:
        t_n = max(16, _round_up(t_n // 2, 16))

    n_pad = _round_up(N, t_n)
    num_tiles = n_pad // t_n

    # Pass-2 N tile: as large as possible (per-grid-step overhead dominated pass),
    # but keep >= 2 tiles and exact divisibility of n_pad.
    t2 = t_n
    while t2 * 2 <= tile_n2 and n_pad % (t2 * 2) == 0 and n_pad // (t2 * 2) >= 2:
        t2 *= 2
    num_tiles2 = n_pad // t2

    # ---- bf16 gather (cast BEFORE fancy-index so the [N, K*C_in] stream is bf16) ----
    feats_z = jnp.concatenate(
        [feats.astype(jnp.bfloat16), jnp.zeros((1, inc), jnp.bfloat16)], axis=0)
    x = feats_z[jnp.asarray(nbr)].reshape(N, kc)                  # bf16 [N, K*C_in]
    x = jnp.pad(x, ((0, n_pad - N), (0, kc_pad - kc)))            # bf16, padded

    w = weight.reshape(kc, outc)
    w = jnp.pad(w, ((0, kc_pad - kc), (0, c_pad - outc))).astype(jnp.bfloat16)
    gamma_p = jnp.pad(gamma.astype(jnp.float32), (0, c_pad - outc))
    beta_p = jnp.pad(beta.astype(jnp.float32), (0, c_pad - outc))

    # ---- pass 1: matmul + per-tile partial BN stats (parallel over N tiles) ----
    flops1 = 2 * n_pad * kc_pad * c_pad
    bytes1 = (n_pad * kc_pad * 2 + kc_pad * c_pad * 2
              + n_pad * c_pad * 2 + num_tiles * 8 * c_pad * 4)
    vmem1 = min(64 << 20, max(32 << 20, 2 * _vmem_pass1(t_n) + (2 << 20)))

    y, stats = pl.pallas_call(
        matmul_stats_kernel,
        out_shape=(
            jax.ShapeDtypeStruct((n_pad, c_pad), jnp.bfloat16),
            jax.ShapeDtypeStruct((num_tiles, 8, c_pad), jnp.float32),
        ),
        grid_spec=pltpu.PrefetchScalarGridSpec(
            num_scalar_prefetch=0,
            grid=(num_tiles,),
            in_specs=[
                pl.BlockSpec((t_n, kc_pad), lambda i: (i, 0)),
                pl.BlockSpec((kc_pad, c_pad), lambda i: (0, 0)),  # weight resident
            ],
            out_specs=[
                pl.BlockSpec((t_n, c_pad), lambda i: (i, 0)),
                pl.BlockSpec((1, 8, c_pad), lambda i: (i, 0, 0)),
            ],
        ),
        compiler_params=pltpu.CompilerParams(
            dimension_semantics=("parallel",),
            vmem_limit_bytes=int(vmem1)),
        cost_estimate=pl.CostEstimate(
            flops=int(flops1), transcendentals=0, bytes_accessed=int(bytes1)),
    )(x, w)

    # ---- reduce BN stats ONCE to per-channel scale/shift (tiny wrapper op) ----
    # NOTE: E[y^2]-E[y]^2 in f32; acceptable here, Welford/two-pass would be
    # more robust for channels with |mean| >> std.
    tot = jnp.sum(stats, axis=0)                                  # [8, C_pad]
    mean = tot[0] * (1.0 / N)
    var = jnp.maximum(tot[1] * (1.0 / N) - mean * mean, 0.0)
    scale = (gamma_p * jax.lax.rsqrt(var + EPS)).reshape(1, c_pad)
    shift = (beta_p - mean * gamma_p * jax.lax.rsqrt(var + EPS)).reshape(1, c_pad)

    # ---- pass 2: streaming BN affine + ReLU over large N tiles ----
    flops2 = 3 * n_pad * c_pad
    bytes2 = n_pad * c_pad * 2 + n_pad * c_pad * 4 + 2 * c_pad * 4
    vmem2_use = 2 * t2 * c_pad * (2 + 4) + 2 * 2 * c_pad * 4
    vmem2 = min(64 << 20, max(32 << 20, 2 * vmem2_use + (2 << 20)))

    out = pl.pallas_call(
        bn_relu_kernel,
        out_shape=jax.ShapeDtypeStruct((n_pad, c_pad), feats.dtype),
        grid_spec=pltpu.PrefetchScalarGridSpec(
            num_scalar_prefetch=0,
            grid=(num_tiles2,),
            in_specs=[
                pl.BlockSpec((t2, c_pad), lambda i: (i, 0)),
                pl.BlockSpec((1, c_pad), lambda i: (0, 0)),
                pl.BlockSpec((1, c_pad), lambda i: (0, 0)),
            ],
            out_specs=pl.BlockSpec((t2, c_pad), lambda i: (i, 0)),
        ),
        compiler_params=pltpu.CompilerParams(
            dimension_semantics=("parallel",),
            vmem_limit_bytes=int(vmem2)),
        cost_estimate=pl.CostEstimate(
            flops=int(flops2), transcendentals=0, bytes_accessed=int(bytes2)),
    )(y, scale, shift)

    return out[:N, :outc]


if __name__ == "__main__":
    key = jax.random.PRNGKey(0)
    k1, k2, k3 = jax.random.split(key, 3)

    # Small sparse problem: 48 occupied voxels in a 4^3 grid.
    N, inc, outc, ks, grid_size = 48, 8, 16, 3, 4
    K = ks ** 3

    perm = jax.random.permutation(k1, grid_size ** 3)[:N]
    coords = jnp.stack(
        [perm // (grid_size * grid_size), (perm // grid_size) % grid_size,
         perm % grid_size],
        axis=1,
    ).astype(jnp.int32)

    feats = jax.random.normal(k2, (N, inc), dtype=jnp.float32)
    # Deterministic synthetic parameters (no checkpoint load).
    weight = 0.1 * jax.random.normal(k3, (K, inc, outc), dtype=jnp.float32)
    gamma = 1.0 + 0.1 * jnp.arange(outc, dtype=jnp.float32)
    beta = 0.01 * jnp.arange(outc, dtype=jnp.float32)

    out = basic_deconvolution_block(feats, coords, weight, gamma, beta, grid_size)
    jax.block_until_ready(out)
    assert out.shape == (N, outc)
    assert bool(jnp.all(jnp.isfinite(out)))
    print("KERNEL_OK")
</pallas_src>

<mosaic_0001>
module attributes {stable_mosaic.version = 11 : i64} {
  func.func @matmul_stats_kernel(%arg0: i32, %arg1: memref<32x256xbf16, #tpu.memory_space<vmem>>, %arg2: memref<256x128xbf16, #tpu.memory_space<vmem>>, %arg3: memref<32x128xbf16, #tpu.memory_space<vmem>>, %arg4: memref<1x8x128xf32, #tpu.memory_space<vmem>>) attributes {dimension_semantics = [#tpu.dimension_semantics<parallel>], iteration_bounds = array<i64: 2>, scalar_prefetch = 0 : i64, scratch_operands = 0 : i64, tpu.core_type = #tpu.core_type<tc>, window_params = [{transform_indices = @transform_0, window_bounds = array<i64: 32, 256>}, {pipeline_mode = #tpu.pipeline_mode<synchronous>, transform_indices = @transform_1, window_bounds = array<i64: 256, 128>}, {transform_indices = @transform_2, window_bounds = array<i64: 32, 128>}, {transform_indices = @transform_3, window_bounds = array<i64: 1, 8, 128>}]} {
    %c0 = arith.constant 0 : index
    %c0_0 = arith.constant 0 : index
    %0 = vector.load %arg1[%c0, %c0_0] : memref<32x256xbf16, #tpu.memory_space<vmem>>, vector<32x256xbf16>
    %c0_1 = arith.constant 0 : index
    %c0_2 = arith.constant 0 : index
    %1 = vector.load %arg2[%c0_1, %c0_2] : memref<256x128xbf16, #tpu.memory_space<vmem>>, vector<256x128xbf16>
    %cst = arith.constant dense<0.000000e+00> : vector<32x128xf32>
    %2 = tpu.matmul %0, %1, %cst {dimension_numbers = #tpu.dot_dimension_numbers<[1], [0], [0], [1], [0, 0, 1, 1], [], []>} : vector<32x256xbf16>, vector<256x128xbf16>, vector<32x128xf32> -> vector<32x128xf32>
    %cst_3 = arith.constant dense<0.000000e+00> : vector<128xf32>
    %3 = vector.multi_reduction <add>, %2, %cst_3 [0] : vector<32x128xf32> to vector<128xf32>
    %4 = vector.shape_cast %3 : vector<128xf32> to vector<1x128xf32>
    %5 = arith.mulf %2, %2 : vector<32x128xf32>
    %cst_4 = arith.constant dense<0.000000e+00> : vector<128xf32>
    %6 = vector.multi_reduction <add>, %5, %cst_4 [0] : vector<32x128xf32> to vector<128xf32>
    %7 = vector.shape_cast %6 : vector<128xf32> to vector<1x128xf32>
    %cst_5 = arith.constant 0.000000e+00 : f32
    %8 = vector.broadcast %cst_5 : f32 to vector<6x128xf32>
    %9 = tpu.concatenate %4, %7, %8 in 0 : vector<1x128xf32>, vector<1x128xf32>, vector<6x128xf32> -> vector<8x128xf32>
    %10 = vector.shape_cast %9 : vector<8x128xf32> to vector<1x8x128xf32>
    %c0_6 = arith.constant 0 : index
    %c0_7 = arith.constant 0 : index
    %c0_8 = arith.constant 0 : index
    %11 = vector.load %arg4[%c0_6, %c0_7, %c0_8] : memref<1x8x128xf32, #tpu.memory_space<vmem>>, vector<1x8x128xf32>
    tpu.vector_store %arg4[%c0_6, %c0_7, %c0_8], %10 {strides = array<i32>} : memref<1x8x128xf32, #tpu.memory_space<vmem>>, vector<1x8x128xf32>,
    %12 = arith.truncf %2 : vector<32x128xf32> to vector<32x128xbf16>
    %c0_9 = arith.constant 0 : index
    %c0_10 = arith.constant 0 : index
    %13 = vector.load %arg3[%c0_9, %c0_10] : memref<32x128xbf16, #tpu.memory_space<vmem>>, vector<32x128xbf16>
    tpu.vector_store %arg3[%c0_9, %c0_10], %12 {strides = array<i32>} : memref<32x128xbf16, #tpu.memory_space<vmem>>, vector<32x128xbf16>,
    return
  }
  func.func @transform_0(%arg0: i32) -> (i32, i32) {
    %c0_i32 = arith.constant 0 : i32
    %c0_i32_0 = arith.constant 0 : i32
    return %arg0, %c0_i32 : i32, i32
  }
  func.func @transform_1(%arg0: i32) -> (i32, i32) {
    %c0_i32 = arith.constant 0 : i32
    %c0_i32_0 = arith.constant 0 : i32
    %c0_i32_1 = arith.constant 0 : i32
    return %c0_i32, %c0_i32_0 : i32, i32
  }
  func.func @transform_2(%arg0: i32) -> (i32, i32) {
    %c0_i32 = arith.constant 0 : i32
    %c0_i32_0 = arith.constant 0 : i32
    return %arg0, %c0_i32 : i32, i32
  }
  func.func @transform_3(%arg0: i32) -> (i32, i32, i32) {
    %c0_i32 = arith.constant 0 : i32
    %c0_i32_0 = arith.constant 0 : i32
    %c0_i32_1 = arith.constant 0 : i32
    return %arg0, %c0_i32, %c0_i32_0 : i32, i32, i32
  }
}

</mosaic_0001>

<llo_original>
// kernel: tpu_custom_call.1
$region0: #{tpu_custom_call.1}
  #allocation0 [shape = 'u32[]', space=smem, size = 0x4, offset = 0x4, fixed_abs, tag = 'smem constant byte address 0x4 - core index']
  #allocation1 [shape = 'u32[144,128]{1,0:T(1,128)}', space=vmem, size = 0x12000, scoped, tag = 'internal scratch']
  %s0 = inlined_call_operand.hbm [shape: bf16[64,256], index: 0, kind: input, shape index: {}]
  %s1 = inlined_call_operand.hbm [shape: bf16[256,128], index: 1, kind: input, shape index: {}]
  %s2 = inlined_call_operand.hbm [shape: bf16[64,128], index: 2, kind: output, shape index: {0}]
  %s3 = inlined_call_operand.hbm [shape: f32[2,8,128], index: 3, kind: output, shape index: {1}]
  %4 = xla_tuple %s2, %s3
  %s5 = sld [smem:[#allocation0]]
  $region57: #{tpu_custom_call.1} parent=0
    _
  %s7 = ssub.s32 1, %s5
  %s8 = scalar_select 0, %s7, %s5
  $region1: #{tpu_custom_call.1} parent=0
    #allocation2 [shape = 'u8[32768]{0}', space=vmem, size = 0x8000, scoped, tag = 'input window, operand 0']
    #allocation3 [shape = 's32[2]{0}', space=sflag, size = 0x8, scoped, tag = 'scoped memory for tpu_custom_call.1']
    #allocation4 [shape = 's32[2]{0}', space=sflag, size = 0x8, scoped, tag = 'scoped memory for tpu_custom_call.1']
    #allocation5 [shape = 'u8[65536]{0}', space=vmem, size = 0x10000, scoped, tag = 'input window, operand 1, single buffered']
    #allocation6 [shape = 's32[1]{0}', space=sflag, size = 0x4, scoped, tag = 'scoped memory for tpu_custom_call.1']
    #allocation7 [shape = 'u8[16384]{0}', space=vmem, size = 0x4000, scoped, tag = 'output window, operand 0']
    #allocation8 [shape = 'u8[8192]{0}', space=vmem, size = 0x2000, scoped, tag = 'output window, operand 1']
    #allocation9 [shape = 's32[2]{0}', space=sflag, size = 0x8, scoped, tag = 'scoped memory for tpu_custom_call.1']
    %9 = vsyncpa [#allocation3], 0
    %s10 = scalar_lea.sflag [#allocation3], 1
    %11 = vsyncpa %s10, 0
    %12 = vsyncpa [#allocation6], 0
    %13 = vsyncpa [#allocation4], 0
    %s14 = scalar_lea.sflag [#allocation4], 1
    %15 = vsyncpa %s14, 0
    %16 = vsyncpa [#allocation9], 0
    %s17 = scalar_lea.sflag [#allocation9], 1
    %18 = vsyncpa %s17, 0
    loop: start=0, step=1, limit=4
    $region2: #{tpu_custom_call.1} parent=1 // loop_pre_header
      _
    $region3: #{tpu_custom_call.1} parent=1 // loop_header
      %s20 = sphi 0, %s24
      %p21 = scmp.ge.s32.totalorder %s20, 4
      %s30 = sphi 0, %s32
      %s33 = sphi 0, %s30
      %s34 = sphi 0, %s33
      %s50 = sphi 0, %s34
      %s54 = sphi 0, %s54
      %s56 = sphi 0, %s54
      %s57 = sphi 0, %s56
      %s71 = sphi 0, %s57
      %s77 = sphi 0, %s79
      %s80 = sphi 0, %s77
      %s81 = sphi 0, %s80
      %s97 = sphi 0, %s81
      %s103 = sphi 0, %s105
      %s106 = sphi 0, %s103
      %s107 = sphi 0, %s106
      %s123 = sphi 0, %s107
    $region4: #{tpu_custom_call.1} parent=1 // loop_header_branch
      %23 = sbr.rel (%p21) target = $region8
    $region5: #{tpu_custom_call.1} parent=1 // loop_body
      %s25 = ssub.s32 %s20, 1
      %s26 = ssub.s32 %s20, 2
      %s27 = sadd.s32 %s20, 1
      %s28 = ssub.s32 %s20, %s27
      %p29 = scmp.eq.s32.totalorder %s28, 0
      %s31 = sadd.s32 %s30, 1
      %s32 = scalar_select %p29, %s30, %s31
      %p35 = pneg %p29
      %p36 = scmp.eq.s32.totalorder %s20, 1
      %p37 = por %p35, %p36
      %p38 = scmp.ne.s32.totalorder %s30, %s33
      %p39 = scmp.eq.s32.totalorder %s20, 0
      %p40 = por %p38, %p39
      %p41 = scmp.ne.s32.totalorder %s30, %s33
      %p42 = scmp.eq.s32.totalorder %s25, 1
      %p43 = por %p41, %p42
      %p44 = scmp.ne.s32.totalorder %s33, %s34
      %p45 = scmp.eq.s32.totalorder %s25, 0
      %p46 = por %p44, %p45
      %p47 = scmp.ne.s32.totalorder %s33, %s34
      %p48 = scmp.eq.s32.totalorder %s26, 1
      %p49 = por %p47, %p48
      %p51 = scmp.ne.s32.totalorder %s34, %s50
      %p52 = scmp.eq.s32.totalorder %s26, 0
      %p53 = por %p51, %p52
      %s55 = sadd.s32 %s54, 1
      %p58 = scmp.eq.s32.totalorder %s20, 1
      %p59 = scmp.ne.s32.totalorder %s54, %s56
      %p60 = scmp.eq.s32.totalorder %s20, 0
      %p61 = por %p59, %p60
      %p62 = scmp.ne.s32.totalorder %s54, %s56
      %p63 = scmp.eq.s32.totalorder %s25, 1
      %p64 = por %p62, %p63
      %p65 = scmp.ne.s32.totalorder %s56, %s57
      %p66 = scmp.eq.s32.totalorder %s25, 0
      %p67 = por %p65, %p66
      %p68 = scmp.ne.s32.totalorder %s56, %s57
      %p69 = scmp.eq.s32.totalorder %s26, 1
      %p70 = por %p68, %p69
      %p72 = scmp.ne.s32.totalorder %s57, %s71
      %p73 = scmp.eq.s32.totalorder %s26, 0
      %p74 = por %p72, %p73
      %s75 = ssub.s32 %s20, %s27
      %p76 = scmp.eq.s32.totalorder %s75, 0
      %s78 = sadd.s32 %s77, 1
      %s79 = scalar_select %p76, %s77, %s78
      %p82 = pneg %p76
      %p83 = scmp.eq.s32.totalorder %s20, 1
      %p84 = por %p82, %p83
      %p85 = scmp.ne.s32.totalorder %s77, %s80
      %p86 = scmp.eq.s32.totalorder %s20, 0
      %p87 = por %p85, %p86
      %p88 = scmp.ne.s32.totalorder %s77, %s80
      %p89 = scmp.eq.s32.totalorder %s25, 1
      %p90 = por %p88, %p89
      %p91 = scmp.ne.s32.totalorder %s80, %s81
      %p92 = scmp.eq.s32.totalorder %s25, 0
      %p93 = por %p91, %p92
      %p94 = scmp.ne.s32.totalorder %s80, %s81
      %p95 = scmp.eq.s32.totalorder %s26, 1
      %p96 = por %p94, %p95
      %p98 = scmp.ne.s32.totalorder %s81, %s97
      %p99 = scmp.eq.s32.totalorder %s26, 0
      %p100 = por %p98, %p99
      %s101 = ssub.s32 %s20, %s27
      %p102 = scmp.eq.s32.totalorder %s101, 0
      %s104 = sadd.s32 %s103, 1
      %s105 = scalar_select %p102, %s103, %s104
      %p108 = pneg %p102
      %p109 = scmp.eq.s32.totalorder %s20, 1
      %p110 = por %p108, %p109
      %p111 = scmp.ne.s32.totalorder %s103, %s106
      %p112 = scmp.eq.s32.totalorder %s20, 0
      %p113 = por %p111, %p112
      %p114 = scmp.ne.s32.totalorder %s103, %s106
      %p115 = scmp.eq.s32.totalorder %s25, 1
      %p116 = por %p114, %p115
      %p117 = scmp.ne.s32.totalorder %s106, %s107
      %p118 = scmp.eq.s32.totalorder %s25, 0
      %p119 = por %p117, %p118
      %p120 = scmp.ne.s32.totalorder %s106, %s107
      %p121 = scmp.eq.s32.totalorder %s26, 1
      %p122 = por %p120, %p121
      %p124 = scmp.ne.s32.totalorder %s107, %s123
      %p125 = scmp.eq.s32.totalorder %s26, 0
      %p126 = por %p124, %p125
      %p127 = scmp.le.s32.totalorder 1, %s20
      %p128 = scmp.lt.s32.totalorder %s20, 3
      %p129 = pnand %p127, %p128
      %p130 = pneg %p129
      // Predicated region
      $region9: #{tpu_custom_call.1} parent=5 // pred_check
        _
      $region10: #{tpu_custom_call.1} parent=5 // pred_check_branch
        %132 = sbr.rel (%p129) target = $region12
      $region11: #{tpu_custom_call.1} parent=5 // pred_region
        %s133 = ssub.s32 %s20, 1
        // Predicated region
        $region13: #{tpu_custom_call.1} parent=11 // pred_check
          %p134 = pneg %p67
        $region14: #{tpu_custom_call.1} parent=11 // pred_check_branch
          %136 = sbr.rel (%p134) target = $region16
        $region15: #{tpu_custom_call.1} parent=11 // pred_region
          %s138 = ssub.s32 2048, 2048
          %139 = vsyncadd [#allocation6], %s138
          %s140 = sshll.u32 [#allocation5], 4
          %s141 = int_to_ptr.vmem [resolvable:$true] %s140
          %146 = dma.hbm_to_vmem [thread:$0]  %s1, 2048, %s141, [#allocation6], 64, 64, 4
        $region16: #{tpu_custom_call.1} parent=11 // pred_fallthru
          _
      $region12: #{tpu_custom_call.1} parent=5 // pred_fallthru
        _
      %p147 = scmp.lt.s32.totalorder %s20, 2
      // Predicated region
      $region17: #{tpu_custom_call.1} parent=5 // pred_check
        %p148 = pneg %p147
      $region18: #{tpu_custom_call.1} parent=5 // pred_check_branch
        %150 = sbr.rel (%p148) target = $region20
      $region19: #{tpu_custom_call.1} parent=5 // pred_region
        // Predicated region
        $region21: #{tpu_custom_call.1} parent=19 // pred_check
          %p151 = pneg %p40
        $region22: #{tpu_custom_call.1} parent=19 // pred_check_branch
          %153 = sbr.rel (%p151) target = $region24
        $region23: #{tpu_custom_call.1} parent=19 // pred_region
          %s154 = sand.u32 %s30, 1
          %s155 = scalar_lea.sflag [#allocation3], %s154
          %s156 = sand.u32 %s30, 1
          %s157 = smul.addr %s156, 32
          %s158 = scalar_lea.vmem [#allocation2], %s157
          %s159 = smul.u32 4, %s20
          %s161 = ssub.s32 512, 512
          %162 = vsyncadd %s155, %s161
          %s163 = smul.addr %s159, 2
          %s164 = smul.addr %s163, 64
          %s165 = scalar_lea.hbm %s0, %s164
          %s166 = sshll.u32 %s158, 4
          %s167 = int_to_ptr.vmem [resolvable:$true] %s166
          %172 = dma.hbm_to_vmem [thread:$0]  %s165, 512, %s167, %s155, 128, 128, 8
        $region24: #{tpu_custom_call.1} parent=19 // pred_fallthru
          _
      $region20: #{tpu_custom_call.1} parent=5 // pred_fallthru
        _
      %p173 = scmp.le.s32.totalorder 1, %s20
      %p174 = scmp.lt.s32.totalorder %s20, 3
      %p175 = pnand %p173, %p174
      %p176 = pneg %p175
      // Predicated region
      $region25: #{tpu_custom_call.1} parent=5 // pred_check
        _
      $region26: #{tpu_custom_call.1} parent=5 // pred_check_branch
        %178 = sbr.rel (%p175) target = $region28
      $region27: #{tpu_custom_call.1} parent=5 // pred_region
        %s179 = ssub.s32 %s20, 1
        %s180 = sand.u32 %s33, 1
        %s181 = scalar_lea.sflag [#allocation3], %s180
        %s182 = sand.u32 %s33, 1
        %s183 = smul.addr %s182, 32
        %s184 = scalar_lea.vmem [#allocation2], %s183
        // Predicated region
        $region29: #{tpu_custom_call.1} parent=27 // pred_check
          %p185 = pneg %p46
        $region30: #{tpu_custom_call.1} parent=27 // pred_check_branch
          %187 = sbr.rel (%p185) target = $region32
        $region31: #{tpu_custom_call.1} parent=27 // pred_region
          %188 = dma.done %s181, 512
        $region32: #{tpu_custom_call.1} parent=27 // pred_fallthru
          _
        // Predicated region
        $region33: #{tpu_custom_call.1} parent=27 // pred_check
          %p189 = pneg %p67
        $region34: #{tpu_custom_call.1} parent=27 // pred_check_branch
          %191 = sbr.rel (%p189) target = $region36
        $region35: #{tpu_custom_call.1} parent=27 // pred_region
          %192 = dma.done [#allocation6], 2048
        $region36: #{tpu_custom_call.1} parent=27 // pred_fallthru
          _
        %s193 = sand.u32 %s33, 1
        %s194 = scalar_lea.sflag [#allocation3], %s193
        %s195 = sand.u32 %s33, 1
        %s196 = smul.addr %s195, 32
        %s197 = scalar_lea.vmem [#allocation2], %s196
        %p198 = pneg %p46
        %p199 = pneg %p43
        %p200 = pneg %p67
        %p201 = pneg %p64
        %p202 = pneg %p93
        %p203 = pneg %p90
        %s204 = sand.u32 %s80, 1
        %s205 = scalar_lea.sflag [#allocation4], %s204
        %s206 = sand.u32 %s80, 1
        %s207 = smul.addr %s206, 16
        %s208 = scalar_lea.vmem [#allocation7], %s207
        %p209 = pneg %p119
        %p210 = pneg %p116
        %s211 = sand.u32 %s106, 1
        %s212 = scalar_lea.sflag [#allocation9], %s211
        %s213 = sand.u32 %s106, 1
        %s214 = smul.addr %s213, 8
        %s215 = scalar_lea.vmem [#allocation8], %s214
        %s216 = smul.u32 4, %s25
        %s217 = smul.u32 4, %s25
        %v219 = vld [vmem:[%s184] sm:$0xff]
        %v220 = vld [vmem:[%s184 + $0x8] sm:$0xff]
        %v221 = vld [vmem:[%s184 + $0x10] sm:$0xff]
        %v222 = vld [vmem:[%s184 + $0x18] sm:$0xff]
        %v223 = vld [vmem:[#allocation5] sm:$0xf]
        %v224 = vld [vmem:[#allocation5 + $0x4] sm:$0xf]
        %v225 = vld [vmem:[#allocation5 + $0x8] sm:$0xf]
        %v226 = vld [vmem:[#allocation5 + $0xc] sm:$0xf]
        %v227 = vld [vmem:[#allocation5 + $0x10] sm:$0xf]
        %v228 = vld [vmem:[#allocation5 + $0x14] sm:$0xf]
        %v229 = vld [vmem:[#allocation5 + $0x18] sm:$0xf]
        %v230 = vld [vmem:[#allocation5 + $0x1c] sm:$0xf]
        %v231 = vld [vmem:[#allocation5 + $0x20] sm:$0xf]
        %v232 = vld [vmem:[#allocation5 + $0x24] sm:$0xf]
        %v233 = vld [vmem:[#allocation5 + $0x28] sm:$0xf]
        %v234 = vld [vmem:[#allocation5 + $0x2c] sm:$0xf]
        %v235 = vld [vmem:[#allocation5 + $0x30] sm:$0xf]
        %v236 = vld [vmem:[#allocation5 + $0x34] sm:$0xf]
        %v237 = vld [vmem:[#allocation5 + $0x38] sm:$0xf]
        %v238 = vld [vmem:[#allocation5 + $0x3c] sm:$0xf]
        %v239 = vld [vmem:[#allocation5 + $0x40] sm:$0xf]
        %v240 = vld [vmem:[#allocation5 + $0x44] sm:$0xf]
        %v241 = vld [vmem:[#allocation5 + $0x48] sm:$0xf]
        %v242 = vld [vmem:[#allocation5 + $0x4c] sm:$0xf]
        %v243 = vld [vmem:[#allocation5 + $0x50] sm:$0xf]
        %v244 = vld [vmem:[#allocation5 + $0x54] sm:$0xf]
        %v245 = vld [vmem:[#allocation5 + $0x58] sm:$0xf]
        %v246 = vld [vmem:[#allocation5 + $0x5c] sm:$0xf]
        %v247 = vld [vmem:[#allocation5 + $0x60] sm:$0xf]
        %v248 = vld [vmem:[#allocation5 + $0x64] sm:$0xf]
        %v249 = vld [vmem:[#allocation5 + $0x68] sm:$0xf]
        %v250 = vld [vmem:[#allocation5 + $0x6c] sm:$0xf]
        %v251 = vld [vmem:[#allocation5 + $0x70] sm:$0xf]
        %v252 = vld [vmem:[#allocation5 + $0x74] sm:$0xf]
        %v253 = vld [vmem:[#allocation5 + $0x78] sm:$0xf]
        %v254 = vld [vmem:[#allocation5 + $0x7c] sm:$0xf]
        %v259 = vunpack.c.l.b16 %v219
        %v260 = vunpack.c.h.b16 %v219
        %v261 = vunpack.c.l.b16 %v220
        %v262 = vunpack.c.h.b16 %v220
        %v263 = vunpack.c.l.b16 %v221
        %v264 = vunpack.c.h.b16 %v221
        %v265 = vunpack.c.l.b16 %v222
        %v266 = vunpack.c.h.b16 %v222
        %v267 = vpack.c.b16 %v261, %v259
        %v268 = vpack.c.b16 %v262, %v260
        %v269 = vpack.c.b16 %v265, %v263
        %v270 = vpack.c.b16 %v266, %v264
        %v307 = vunpack.c.l.b16 %v223
        %v308 = vunpack.c.l.b16 %v224
        %v309 = vunpack.c.l.b16 %v225
        %v310 = vunpack.c.l.b16 %v226
        %v311 = vunpack.c.l.b16 %v227
        %v312 = vunpack.c.l.b16 %v228
        %v313 = vunpack.c.l.b16 %v229
        %v314 = vunpack.c.l.b16 %v230
        %v315 = vunpack.c.l.b16 %v231
        %v316 = vunpack.c.l.b16 %v232
        %v317 = vunpack.c.l.b16 %v233
        %v318 = vunpack.c.l.b16 %v234
        %v319 = vunpack.c.l.b16 %v235
        %v320 = vunpack.c.l.b16 %v236
        %v321 = vunpack.c.l.b16 %v237
        %v322 = vunpack.c.l.b16 %v238
        %v323 = vunpack.c.l.b16 %v239
        %v324 = vunpack.c.l.b16 %v240
        %v325 = vunpack.c.l.b16 %v241
        %v326 = vunpack.c.l.b16 %v242
        %v327 = vunpack.c.l.b16 %v243
        %v328 = vunpack.c.l.b16 %v244
        %v329 = vunpack.c.l.b16 %v245
        %v330 = vunpack.c.l.b16 %v246
        %v331 = vunpack.c.l.b16 %v247
        %v332 = vunpack.c.l.b16 %v248
        %v333 = vunpack.c.l.b16 %v249
        %v334 = vunpack.c.l.b16 %v250
        %v335 = vunpack.c.l.b16 %v251
        %v336 = vunpack.c.l.b16 %v252
        %v337 = vunpack.c.l.b16 %v253
        %v338 = vunpack.c.l.b16 %v254
        %v339 = vpack.c.b16 %v308, %v307
        %v340 = vpack.c.b16 %v310, %v309
        %v341 = vpack.c.b16 %v312, %v311
        %v342 = vpack.c.b16 %v314, %v313
        %v343 = vpack.c.b16 %v316, %v315
        %v344 = vpack.c.b16 %v318, %v317
        %v345 = vpack.c.b16 %v320, %v319
        %v346 = vpack.c.b16 %v322, %v321
        %v347 = vpack.c.b16 %v324, %v323
        %v348 = vpack.c.b16 %v326, %v325
        %v349 = vpack.c.b16 %v328, %v327
        %v350 = vpack.c.b16 %v330, %v329
        %v351 = vpack.c.b16 %v332, %v331
        %v352 = vpack.c.b16 %v334, %v333
        %v353 = vpack.c.b16 %v336, %v335
        %v354 = vpack.c.b16 %v338, %v337
        %371 = vmatprep.subr.bf16.mxu0 0
        %372 = vmatpush1.bf16.msra.mxu0 %v339
        %373 = vmatprep.subr.bf16.mxu0 0
        %374 = vmatpush1.bf16.msra.mxu0 %v340
        %375 = vmatprep.subr.bf16.mxu0 0
        %376 = vmatpush1.bf16.msra.mxu0 %v341
        %377 = vmatprep.subr.bf16.mxu0 0
        %378 = vmatpush1.bf16.msra.mxu0 %v342
        %379 = vmatprep.subr.bf16.mxu0 0
        %380 = vmatpush1.bf16.msra.mxu0 %v343
        %381 = vmatprep.subr.bf16.mxu0 0
        %382 = vmatpush1.bf16.msra.mxu0 %v344
        %383 = vmatprep.subr.bf16.mxu0 0
        %384 = vmatpush1.bf16.msra.mxu0 %v345
        %385 = vmatprep.subr.bf16.mxu0 0
        %386 = vmatpush1.bf16.msra.mxu0 %v346
        %387 = vmatprep.subr.bf16.mxu0 0
        %388 = vmatpush1.bf16.msra.mxu0 %v347
        %389 = vmatprep.subr.bf16.mxu0 0
        %390 = vmatpush1.bf16.msra.mxu0 %v348
        %391 = vmatprep.subr.bf16.mxu0 0
        %392 = vmatpush1.bf16.msra.mxu0 %v349
        %393 = vmatprep.subr.bf16.mxu0 0
        %394 = vmatpush1.bf16.msra.mxu0 %v350
        %395 = vmatprep.subr.bf16.mxu0 0
        %396 = vmatpush1.bf16.msra.mxu0 %v351
        %397 = vmatprep.subr.bf16.mxu0 0
        %398 = vmatpush1.bf16.msra.mxu0 %v352
        %399 = vmatprep.subr.bf16.mxu0 0
        %400 = vmatpush1.bf16.msra.mxu0 %v353
        %401 = vmatprep.subr.bf16.mxu0 0
        %402 = vmatpush1.bf16.msra.mxu0 %v354
        %403 = vmatprep.mubr.bf16.mxu0 %v268
        %404 = vmatmul.mubr.bf16.gmra.mrb[0].mxu0 %v267
        %v405 = vpop.f32.mrb[0].mxu0
        %v406 = vadd.f32 0.0, %v405
        %v407 = vpop.f32.mrb[0].mxu0
        %v408 = vpop.f32.mrb[0].mxu0
        %v409 = vadd.f32 0.0, %v408
        %v410 = vpop.f32.mrb[0].mxu0
        %411 = vmatprep.mubr.bf16.mxu0 %v270
        %412 = vmatmul.mubr.bf16.gmra.mrb[0].mxu0 %v269
        %v413 = vpop.f32.mrb[0].mxu0
        %v414 = vadd.f32 0.0, %v413
        %v415 = vpop.f32.mrb[0].mxu0
        %v416 = vpop.f32.mrb[0].mxu0
        %v417 = vadd.f32 0.0, %v416
        %v418 = vpop.f32.mrb[0].mxu0
        %419 = vdwg.mxu0
        %v420 = vadd.f32 %v406, %v409
        %v421 = vadd.f32 %v420, %v414
        %v422 = vadd.f32 %v421, %v417
        %v423 = vrot.slane %v422, 4
        %v424 = vadd.f32 %v422, %v423
        %v425 = vrot.slane %v424, 2
        %v426 = vadd.f32 %v424, %v425
        %v427 = vrot.slane %v426, 1
        %v428 = vadd.f32 %v426, %v427
        %v429 = vmul.f32 %v406, %v406
        %v430 = vmul.f32 %v409, %v409
        %v431 = vmul.f32 %v414, %v414
        %v432 = vmul.f32 %v417, %v417
        %v433 = vadd.f32 %v429, %v430
        %v434 = vadd.f32 %v433, %v431
        %v435 = vadd.f32 %v434, %v432
        %v436 = vrot.slane %v435, 4
        %v437 = vadd.f32 %v435, %v436
        %v438 = vrot.slane %v437, 2
        %v439 = vadd.f32 %v437, %v438
        %v440 = vrot.slane %v439, 1
        %v441 = vadd.f32 %v439, %v440
        %vm442 = vcmask 1040384
        %v443 = vsel %vm442, %v428, %v441
        %vm444 = vcmask 1041408
        %v445 = vsel %vm444, %v443, 0.0
        %446 = vst [vmem:[%s215] sm:$0xff] %v445
        %v447 = vpack.c.bf16 %v409, %v406
        %v448 = vpack.c.bf16 %v417, %v414
        %v451 = vunpack.c.l.b16 %v447
        %v452 = vunpack.c.h.b16 %v447
        %v453 = vunpack.c.l.b16 %v448
        %v454 = vunpack.c.h.b16 %v448
        %v455 = vpack.c.b16 %v451, %v451
        %v456 = vpack.c.b16 %v452, %v452
        %v457 = vpack.c.b16 %v453, %v453
        %v458 = vpack.c.b16 %v454, %v454
        %463 = vst [vmem:[%s208] sm:$0xf] %v455
        %464 = vst [vmem:[%s208 + $0x4] sm:$0xf] %v456
        %465 = vst [vmem:[%s208 + $0x8] sm:$0xf] %v457
        %466 = vst [vmem:[%s208 + $0xc] sm:$0xf] %v458
        %s467 = sand.u32 %s80, 1
        %s468 = scalar_lea.sflag [#allocation4], %s467
        %s469 = sand.u32 %s80, 1
        %s470 = smul.addr %s469, 16
        %s471 = scalar_lea.vmem [#allocation7], %s470
        %s472 = sand.u32 %s106, 1
        %s473 = scalar_lea.sflag [#allocation9], %s472
        %s474 = sand.u32 %s106, 1
        %s475 = smul.addr %s474, 8
        %s476 = scalar_lea.vmem [#allocation8], %s475
        // Predicated region
        $region37: #{tpu_custom_call.1} parent=27 // pred_check
          %p477 = pneg %p90
        $region38: #{tpu_custom_call.1} parent=27 // pred_check_branch
          %479 = sbr.rel (%p477) target = $region40
        $region39: #{tpu_custom_call.1} parent=27 // pred_region
          %s480 = smul.u32 4, %s25
          %s482 = ssub.s32 256, 256
          %483 = vsyncadd %s468, %s482
          %s484 = smul.addr %s480, 64
          %s485 = scalar_lea.hbm %s2, %s484
          %s486 = sshll.u32 %s471, 4
          %s487 = int_to_ptr.vmem [resolvable:$true] %s486
          %492 = dma.vmem_to_hbm [thread:$0]  %s487, 256, %s485, %s468, 64, 64, 4
        $region40: #{tpu_custom_call.1} parent=27 // pred_fallthru
          _
        // Predicated region
        $region41: #{tpu_custom_call.1} parent=27 // pred_check
          %p493 = pneg %p116
        $region42: #{tpu_custom_call.1} parent=27 // pred_check_branch
          %495 = sbr.rel (%p493) target = $region44
        $region43: #{tpu_custom_call.1} parent=27 // pred_region
          %s497 = ssub.s32 128, 128
          %498 = vsyncadd %s473, %s497
          %s499 = smul.addr %s25, 128
          %s500 = scalar_lea.hbm %s3, %s499
          %s502 = sshll.u32 %s476, 4
          %s503 = int_to_ptr.vmem [resolvable:$true] %s502
          %505 = dma.vmem_to_hbm [thread:$0]  %s503, 128, %s500, %s473
        $region44: #{tpu_custom_call.1} parent=27 // pred_fallthru
          _
      $region28: #{tpu_custom_call.1} parent=5 // pred_fallthru
        _
      %p506 = scmp.le.s32.totalorder 2, %s20
      // Predicated region
      $region45: #{tpu_custom_call.1} parent=5 // pred_check
        %p507 = pneg %p506
      $region46: #{tpu_custom_call.1} parent=5 // pred_check_branch
        %509 = sbr.rel (%p507) target = $region48
      $region47: #{tpu_custom_call.1} parent=5 // pred_region
        %s510 = ssub.s32 %s20, 2
        // Predicated region
        $region49: #{tpu_custom_call.1} parent=47 // pred_check
          %p511 = pneg %p96
        $region50: #{tpu_custom_call.1} parent=47 // pred_check_branch
          %513 = sbr.rel (%p511) target = $region52
        $region51: #{tpu_custom_call.1} parent=47 // pred_region
          %s514 = sand.u32 %s81, 1
          %s515 = scalar_lea.sflag [#allocation4], %s514
          %s516 = sand.u32 %s81, 1
          %s517 = smul.addr %s516, 16
          %s518 = scalar_lea.vmem [#allocation7], %s517
          %519 = dma.done %s515, 256
        $region52: #{tpu_custom_call.1} parent=47 // pred_fallthru
          _
        // Predicated region
        $region53: #{tpu_custom_call.1} parent=47 // pred_check
          %p520 = pneg %p122
        $region54: #{tpu_custom_call.1} parent=47 // pred_check_branch
          %522 = sbr.rel (%p520) target = $region56
        $region55: #{tpu_custom_call.1} parent=47 // pred_region
          %s523 = sand.u32 %s107, 1
          %s524 = scalar_lea.sflag [#allocation9], %s523
          %s525 = sand.u32 %s107, 1
          %s526 = smul.addr %s525, 8
          %s527 = scalar_lea.vmem [#allocation8], %s526
          %528 = dma.done %s524, 128
        $region56: #{tpu_custom_call.1} parent=47 // pred_fallthru
          _
      $region48: #{tpu_custom_call.1} parent=5 // pred_fallthru
        _
    $region6: #{tpu_custom_call.1} parent=1 // loop_footer
      %s24 = sadd.s32 1, %s20
    $region7: #{tpu_custom_call.1} parent=1 // loop_footer_branch
      %19 = sbr.rel target = $region3
    $region8: #{tpu_custom_call.1} parent=1 // loop_exit
      _
    %529 = vsyncpa [#allocation3], 1
    %s530 = scalar_lea.sflag [#allocation3], 1
    %531 = vsyncpa %s530, 1
    %532 = vsyncpa [#allocation6], 1
    %533 = vsyncpa [#allocation4], 1
    %s534 = scalar_lea.sflag [#allocation4], 1
    %535 = vsyncpa %s534, 1
    %536 = vsyncpa [#allocation9], 1
    %s537 = scalar_lea.sflag [#allocation9], 1
    %538 = vsyncpa %s537, 1

</llo_original>
